<compile_context>
chip_gen: v7x
topology: tpu7x:2x2x1
jax: 0.10.0
libtpu: 0.0.40
codegen_flags: <defaults>
</compile_context>

<pallas_src>
import jax
import jax.numpy as jnp
from jax.experimental import pallas as pl
from jax.experimental.pallas import tpu as pltpu


# ----------------------------------------------------------------------------
# Pass 1: channel mix (1x1x1 conv) + per-out-channel sum / sum-of-squares.
# y = W @ x never hits HBM; only (Cout, 1) partial stats are written per block.
# ----------------------------------------------------------------------------
def conv_stats_kernel(x_ref, w_ref, csum_ref, cssq_ref, sum_acc, ssq_acc):
    j = pl.program_id(1)

    @pl.when(j == 0)
    def _():
        sum_acc[...] = jnp.zeros_like(sum_acc)
        ssq_acc[...] = jnp.zeros_like(ssq_acc)

    x = x_ref[0]                                                     # (Cin, TL)
    y = jnp.dot(w_ref[...], x, preferred_element_type=jnp.float32)   # (Cout, TL)
    # Per-step lane reduction into a tiny accumulator: column-wise VALU adds
    # collapse the TL/128 vregs, one cross-lane tail per row rides in slack.
    sum_acc[...] += jnp.sum(y, axis=1, keepdims=True)                # (Cout, 1)
    ssq_acc[...] += jnp.sum(y * y, axis=1, keepdims=True)            # (Cout, 1)

    @pl.when(j == pl.num_programs(1) - 1)
    def _():
        csum_ref[0] = sum_acc[...]
        cssq_ref[0] = cssq_val = ssq_acc[...]


# ----------------------------------------------------------------------------
# Pass 2: recompute channel mix with BN-scale-folded weight, add shift, ReLU.
# Lane-dense (Cout, TL) output tiles.
# ----------------------------------------------------------------------------
def bn_relu_kernel(x_ref, ws_ref, shift_ref, o_ref):
    x = x_ref[0]                                                     # (Cin, TL)
    y = jnp.dot(ws_ref[...], x, preferred_element_type=jnp.float32)  # (Cout, TL)
    o_ref[0] = jnp.maximum(y + shift_ref[...], 0.0).astype(o_ref.dtype)


def _spatial_tiling(s, max_tile=32768):
    """Return (s_pad, tl): tl a multiple of 128 (lane-dense), s_pad % tl == 0."""
    s128 = pl.cdiv(s, 128) * 128
    if s128 <= max_tile:
        return s128, s128
    cap = (max_tile // 128) * 128
    t = cap
    while t >= 128:
        if s128 % t == 0:
            return s128, t
        t -= 128
    # No 128-multiple divisor <= max_tile: pad up to a multiple of the cap tile.
    return pl.cdiv(s128, cap) * cap, cap


def band_expansion(x_ncdhw, conv_w, gamma, beta, *, eps=1e-5, max_tile=32768):
    """x_ncdhw: (N, Cin, D, H, W) f32.  conv_w: (Cout, Cin) f32 (1x1x1 conv)."""
    n, cin, d, h, w = x_ncdhw.shape
    cout = conv_w.shape[0]
    s = d * h * w
    m = n * s  # true element count per channel for the BN batch statistics

    s_pad, tl = _spatial_tiling(s, max_tile)
    steps = s_pad // tl

    # Zero-copy view: NCDHW -> (N, Cin, D*H*W); pad spatial to lane-aligned tiles.
    x3d = x_ncdhw.reshape(n, cin, s).astype(jnp.float32)
    if s_pad != s:
        # Padded columns give y = W @ 0 = 0 -> contribute nothing to sum/ssq.
        x3d = jnp.pad(x3d, ((0, 0), (0, 0), (0, s_pad - s)))
    w2d = conv_w.reshape(cout, -1).astype(jnp.float32)               # (Cout, Cin)

    # ---- Pass 1: per-(batch,split) partial channel stats ----
    nsplit = 1
    if n == 1 and steps >= 2 and steps % 2 == 0:
        nsplit = 2  # spatial core-split so both v7x TensorCores reduce

    if nsplit == 1:
        grid1 = (n, steps)
        x_map1 = lambda i, j: (i, 0, j)
        stat_map = lambda i, j: (i, 0, 0)
    else:
        steps_per = steps // nsplit
        grid1 = (n * nsplit, steps_per)
        x_map1 = lambda p, j: (p // nsplit, 0, (p % nsplit) * steps_per + j)
        stat_map = lambda p, j: (p, 0, 0)

    csum, cssq = pl.pallas_call(
        conv_stats_kernel,
        out_shape=(
            jax.ShapeDtypeStruct((grid1[0], cout, 1), jnp.float32),
            jax.ShapeDtypeStruct((grid1[0], cout, 1), jnp.float32),
        ),
        grid_spec=pltpu.PrefetchScalarGridSpec(
            num_scalar_prefetch=0,
            grid=grid1,
            in_specs=[
                pl.BlockSpec((1, cin, tl), x_map1),
                pl.BlockSpec((cout, cin), lambda i, j: (0, 0)),
            ],
            out_specs=[
                pl.BlockSpec((1, cout, 1), stat_map),
                pl.BlockSpec((1, cout, 1), stat_map),
            ],
            scratch_shapes=[
                pltpu.VMEM((cout, 1), jnp.float32),
                pltpu.VMEM((cout, 1), jnp.float32),
            ],
        ),
        compiler_params=pltpu.CompilerParams(
            dimension_semantics=("parallel", "arbitrary"),
        ),
    )(x3d, w2d)

    # ---- Tiny (Cout,)-sized BN folding in plain JAX glue ----
    tot_sum = jnp.sum(csum[:, :, 0], axis=0)                         # (Cout,)
    tot_ssq = jnp.sum(cssq[:, :, 0], axis=0)                         # (Cout,)
    mean = tot_sum / m
    # TODO(synk): E[y^2]-E[y]^2 in f32 can lose precision for very large m or
    # large |mean|; a shifted / compensated second moment would be safer.
    var = jnp.maximum(tot_ssq / m - mean * mean, 0.0)                # biased var (BN fwd)
    inv_std = jax.lax.rsqrt(var + eps)
    scale = gamma.astype(jnp.float32) * inv_std                      # (Cout,)
    shift = (beta.astype(jnp.float32) - mean * scale)[:, None]       # (Cout, 1)
    w_scaled = scale[:, None] * w2d                                  # BN scale folded into W
    # TODO(synk): BatchNorm3d training also updates running_mean / running_var
    # (unbiased var); that buffer update is not part of the forward output.

    # ---- Pass 2: channel mix (scale-folded) + shift + ReLU, lane-dense out ----
    out3d = pl.pallas_call(
        bn_relu_kernel,
        out_shape=jax.ShapeDtypeStruct((n, cout, s_pad), jnp.float32),
        grid_spec=pltpu.PrefetchScalarGridSpec(
            num_scalar_prefetch=0,
            grid=(n, steps),
            in_specs=[
                pl.BlockSpec((1, cin, tl), lambda i, j: (i, 0, j)),
                pl.BlockSpec((cout, cin), lambda i, j: (0, 0)),
                pl.BlockSpec((cout, 1), lambda i, j: (0, 0)),
            ],
            out_specs=pl.BlockSpec((1, cout, tl), lambda i, j: (i, 0, j)),
        ),
        compiler_params=pltpu.CompilerParams(
            dimension_semantics=("parallel", "parallel"),
        ),
    )(x3d, w_scaled, shift)

    if s_pad != s:
        out3d = out3d[:, :, :s]
    return out3d.reshape(n, cout, d, h, w)


def reference(x_ncdhw, conv_w, gamma, beta, eps=1e-5):
    cout = conv_w.shape[0]
    y = jnp.einsum("ncdhw,oc->nodhw", x_ncdhw, conv_w)
    mean = jnp.mean(y, axis=(0, 2, 3, 4), keepdims=True)
    var = jnp.mean((y - mean) ** 2, axis=(0, 2, 3, 4), keepdims=True)
    yhat = (y - mean) * jax.lax.rsqrt(var + eps)
    yhat = yhat * gamma.reshape(1, cout, 1, 1, 1) + beta.reshape(1, cout, 1, 1, 1)
    return jnp.maximum(yhat, 0.0)


if __name__ == "__main__":
    key = jax.random.PRNGKey(0)
    k_x, k_w, k_g, k_b = jax.random.split(key, 4)

    N, C_IN, C_OUT, D, H, W = 2, 4, 8, 4, 8, 8

    x = jax.random.normal(k_x, (N, C_IN, D, H, W), dtype=jnp.float32)
    # Conv3d(kernel_size=1, bias=False) weight (Cout, Cin, 1, 1, 1) -> (Cout, Cin)
    conv_w = jax.random.normal(k_w, (C_OUT, C_IN), dtype=jnp.float32) * 0.1
    gamma = 1.0 + 0.1 * jax.random.normal(k_g, (C_OUT,), dtype=jnp.float32)
    beta = 0.1 * jax.random.normal(k_b, (C_OUT,), dtype=jnp.float32)

    out = jax.jit(band_expansion)(x, conv_w, gamma, beta)
    out = jax.block_until_ready(out)

    ref = reference(x, conv_w, gamma, beta)
    assert out.shape == (N, C_OUT, D, H, W)
    assert jnp.allclose(out, ref, atol=1e-4, rtol=1e-4), "mismatch vs reference"

    print("KERNEL_OK")
</pallas_src>

<mosaic_0001>
module attributes {stable_mosaic.version = 11 : i64} {
  func.func @conv_stats_kernel(%arg0: i32, %arg1: i32, %arg2: memref<1x4x256xf32, #tpu.memory_space<vmem>>, %arg3: memref<8x4xf32, #tpu.memory_space<vmem>>, %arg4: memref<1x8x1xf32, #tpu.memory_space<vmem>>, %arg5: memref<1x8x1xf32, #tpu.memory_space<vmem>>, %arg6: memref<8x1xf32, #tpu.memory_space<vmem>>, %arg7: memref<8x1xf32, #tpu.memory_space<vmem>>) attributes {dimension_semantics = [#tpu.dimension_semantics<parallel>, #tpu.dimension_semantics<arbitrary>], iteration_bounds = array<i64: 2, 1>, scalar_prefetch = 0 : i64, scratch_operands = 2 : i64, tpu.core_type = #tpu.core_type<tc>, window_params = [{transform_indices = @transform_0, window_bounds = array<i64: 1, 4, 256>}, {pipeline_mode = #tpu.pipeline_mode<synchronous>, transform_indices = @transform_1, window_bounds = array<i64: 8, 4>}, {transform_indices = @transform_2, window_bounds = array<i64: 1, 8, 1>}, {transform_indices = @transform_3, window_bounds = array<i64: 1, 8, 1>}]} {
    %c0_i32 = arith.constant 0 : i32
    %0 = arith.cmpi eq, %arg1, %c0_i32 : i32
    %1 = arith.extui %0 : i1 to i32
    %c0_i32_0 = arith.constant 0 : i32
    %2 = arith.cmpi ne, %1, %c0_i32_0 : i32
    scf.if %2 {
      %cst_17 = arith.constant 0.000000e+00 : f32
      %21 = vector.broadcast %cst_17 : f32 to vector<8x1xf32>
      %c0_18 = arith.constant 0 : index
      %c0_19 = arith.constant 0 : index
      %22 = vector.load %arg6[%c0_18, %c0_19] : memref<8x1xf32, #tpu.memory_space<vmem>>, vector<8x1xf32>
      tpu.vector_store %arg6[%c0_18, %c0_19], %21 {strides = array<i32>} : memref<8x1xf32, #tpu.memory_space<vmem>>, vector<8x1xf32>,
      %cst_20 = arith.constant 0.000000e+00 : f32
      %23 = vector.broadcast %cst_20 : f32 to vector<8x1xf32>
      %c0_21 = arith.constant 0 : index
      %c0_22 = arith.constant 0 : index
      %24 = vector.load %arg7[%c0_21, %c0_22] : memref<8x1xf32, #tpu.memory_space<vmem>>, vector<8x1xf32>
      tpu.vector_store %arg7[%c0_21, %c0_22], %23 {strides = array<i32>} : memref<8x1xf32, #tpu.memory_space<vmem>>, vector<8x1xf32>,
    } else {
    }
    %c0 = arith.constant 0 : index
    %c0_1 = arith.constant 0 : index
    %c0_2 = arith.constant 0 : index
    %3 = vector.load %arg2[%c0, %c0_1, %c0_2] : memref<1x4x256xf32, #tpu.memory_space<vmem>>, vector<1x4x256xf32>
    %4 = vector.shape_cast %3 : vector<1x4x256xf32> to vector<4x256xf32>
    %c0_3 = arith.constant 0 : index
    %c0_4 = arith.constant 0 : index
    %5 = vector.load %arg3[%c0_3, %c0_4] : memref<8x4xf32, #tpu.memory_space<vmem>>, vector<8x4xf32>
    %cst = arith.constant dense<0.000000e+00> : vector<8x256xf32>
    %6 = tpu.matmul %5, %4, %cst {dimension_numbers = #tpu.dot_dimension_numbers<[1], [0], [0], [1], [0, 0, 1, 1], [], []>} : vector<8x4xf32>, vector<4x256xf32>, vector<8x256xf32> -> vector<8x256xf32>
    %c0_5 = arith.constant 0 : index
    %c0_6 = arith.constant 0 : index
    %7 = vector.load %arg6[%c0_5, %c0_6] : memref<8x1xf32, #tpu.memory_space<vmem>>, vector<8x1xf32>
    %cst_7 = arith.constant dense<0.000000e+00> : vector<8xf32>
    %8 = vector.multi_reduction <add>, %6, %cst_7 [1] : vector<8x256xf32> to vector<8xf32>
    %9 = vector.shape_cast %8 : vector<8xf32> to vector<8x1xf32>
    %10 = arith.addf %7, %9 : vector<8x1xf32>
    %c0_8 = arith.constant 0 : index
    %c0_9 = arith.constant 0 : index
    %11 = vector.load %arg6[%c0_8, %c0_9] : memref<8x1xf32, #tpu.memory_space<vmem>>, vector<8x1xf32>
    tpu.vector_store %arg6[%c0_8, %c0_9], %10 {strides = array<i32>} : memref<8x1xf32, #tpu.memory_space<vmem>>, vector<8x1xf32>,
    %c0_10 = arith.constant 0 : index
    %c0_11 = arith.constant 0 : index
    %12 = vector.load %arg7[%c0_10, %c0_11] : memref<8x1xf32, #tpu.memory_space<vmem>>, vector<8x1xf32>
    %13 = arith.mulf %6, %6 : vector<8x256xf32>
    %cst_12 = arith.constant dense<0.000000e+00> : vector<8xf32>
    %14 = vector.multi_reduction <add>, %13, %cst_12 [1] : vector<8x256xf32> to vector<8xf32>
    %15 = vector.shape_cast %14 : vector<8xf32> to vector<8x1xf32>
    %16 = arith.addf %12, %15 : vector<8x1xf32>
    %c0_13 = arith.constant 0 : index
    %c0_14 = arith.constant 0 : index
    %17 = vector.load %arg7[%c0_13, %c0_14] : memref<8x1xf32, #tpu.memory_space<vmem>>, vector<8x1xf32>
    tpu.vector_store %arg7[%c0_13, %c0_14], %16 {strides = array<i32>} : memref<8x1xf32, #tpu.memory_space<vmem>>, vector<8x1xf32>,
    %c0_i32_15 = arith.constant 0 : i32
    %18 = arith.cmpi eq, %arg1, %c0_i32_15 : i32
    %19 = arith.extui %18 : i1 to i32
    %c0_i32_16 = arith.constant 0 : i32
    %20 = arith.cmpi ne, %19, %c0_i32_16 : i32
    scf.if %20 {
      %c0_17 = arith.constant 0 : index
      %c0_18 = arith.constant 0 : index
      %21 = vector.load %arg6[%c0_17, %c0_18] : memref<8x1xf32, #tpu.memory_space<vmem>>, vector<8x1xf32>
      %c0_19 = arith.constant 0 : index
      %c0_20 = arith.constant 0 : index
      %c0_21 = arith.constant 0 : index
      %22 = vector.load %arg4[%c0_19, %c0_20, %c0_21] : memref<1x8x1xf32, #tpu.memory_space<vmem>>, vector<1x8x1xf32>
      %23 = vector.shape_cast %22 : vector<1x8x1xf32> to vector<8x1xf32>
      %24 = vector.shape_cast %21 : vector<8x1xf32> to vector<1x8x1xf32>
      tpu.vector_store %arg4[%c0_19, %c0_20, %c0_21], %24 {strides = array<i32>} : memref<1x8x1xf32, #tpu.memory_space<vmem>>, vector<1x8x1xf32>,
      %c0_22 = arith.constant 0 : index
      %c0_23 = arith.constant 0 : index
      %25 = vector.load %arg7[%c0_22, %c0_23] : memref<8x1xf32, #tpu.memory_space<vmem>>, vector<8x1xf32>
      %c0_24 = arith.constant 0 : index
      %c0_25 = arith.constant 0 : index
      %c0_26 = arith.constant 0 : index
      %26 = vector.load %arg5[%c0_24, %c0_25, %c0_26] : memref<1x8x1xf32, #tpu.memory_space<vmem>>, vector<1x8x1xf32>
      %27 = vector.shape_cast %26 : vector<1x8x1xf32> to vector<8x1xf32>
      %28 = vector.shape_cast %25 : vector<8x1xf32> to vector<1x8x1xf32>
      tpu.vector_store %arg5[%c0_24, %c0_25, %c0_26], %28 {strides = array<i32>} : memref<1x8x1xf32, #tpu.memory_space<vmem>>, vector<1x8x1xf32>,
    } else {
    }
    return
  }
  func.func @transform_0(%arg0: i32, %arg1: i32) -> (i32, i32, i32) {
    %c0_i32 = arith.constant 0 : i32
    %c0_i32_0 = arith.constant 0 : i32
    return %arg0, %c0_i32, %arg1 : i32, i32, i32
  }
  func.func @transform_1(%arg0: i32, %arg1: i32) -> (i32, i32) {
    %c0_i32 = arith.constant 0 : i32
    %c0_i32_0 = arith.constant 0 : i32
    %c0_i32_1 = arith.constant 0 : i32
    return %c0_i32, %c0_i32_0 : i32, i32
  }
  func.func @transform_2(%arg0: i32, %arg1: i32) -> (i32, i32, i32) {
    %c0_i32 = arith.constant 0 : i32
    %c0_i32_0 = arith.constant 0 : i32
    %c0_i32_1 = arith.constant 0 : i32
    return %arg0, %c0_i32, %c0_i32_0 : i32, i32, i32
  }
  func.func @transform_3(%arg0: i32, %arg1: i32) -> (i32, i32, i32) {
    %c0_i32 = arith.constant 0 : i32
    %c0_i32_0 = arith.constant 0 : i32
    %c0_i32_1 = arith.constant 0 : i32
    return %arg0, %c0_i32, %c0_i32_0 : i32, i32, i32
  }
}

module attributes {stable_mosaic.version = 11 : i64} {
  func.func @bn_relu_kernel(%arg0: i32, %arg1: i32, %arg2: memref<1x4x256xf32, #tpu.memory_space<vmem>>, %arg3: memref<8x4xf32, #tpu.memory_space<vmem>>, %arg4: memref<8x1xf32, #tpu.memory_space<vmem>>, %arg5: memref<1x8x256xf32, #tpu.memory_space<vmem>>) attributes {dimension_semantics = [#tpu.dimension_semantics<parallel>, #tpu.dimension_semantics<parallel>], iteration_bounds = array<i64: 2, 1>, scalar_prefetch = 0 : i64, scratch_operands = 0 : i64, tpu.core_type = #tpu.core_type<tc>, window_params = [{transform_indices = @transform_0, window_bounds = array<i64: 1, 4, 256>}, {pipeline_mode = #tpu.pipeline_mode<synchronous>, transform_indices = @transform_1, window_bounds = array<i64: 8, 4>}, {pipeline_mode = #tpu.pipeline_mode<synchronous>, transform_indices = @transform_2, window_bounds = array<i64: 8, 1>}, {transform_indices = @transform_3, window_bounds = array<i64: 1, 8, 256>}]} {
    %c0 = arith.constant 0 : index
    %c0_0 = arith.constant 0 : index
    %c0_1 = arith.constant 0 : index
    %0 = vector.load %arg2[%c0, %c0_0, %c0_1] : memref<1x4x256xf32, #tpu.memory_space<vmem>>, vector<1x4x256xf32>
    %1 = vector.shape_cast %0 : vector<1x4x256xf32> to vector<4x256xf32>
    %c0_2 = arith.constant 0 : index
    %c0_3 = arith.constant 0 : index
    %2 = vector.load %arg3[%c0_2, %c0_3] : memref<8x4xf32, #tpu.memory_space<vmem>>, vector<8x4xf32>
    %cst = arith.constant dense<0.000000e+00> : vector<8x256xf32>
    %3 = tpu.matmul %2, %1, %cst {dimension_numbers = #tpu.dot_dimension_numbers<[1], [0], [0], [1], [0, 0, 1, 1], [], []>} : vector<8x4xf32>, vector<4x256xf32>, vector<8x256xf32> -> vector<8x256xf32>
    %c0_4 = arith.constant 0 : index
    %c0_5 = arith.constant 0 : index
    %4 = vector.load %arg4[%c0_4, %c0_5] : memref<8x1xf32, #tpu.memory_space<vmem>>, vector<8x1xf32>
    %5 = vector.broadcast %4 : vector<8x1xf32> to vector<8x256xf32>
    %6 = arith.addf %3, %5 : vector<8x256xf32>
    %cst_6 = arith.constant 0.000000e+00 : f32
    %7 = vector.broadcast %cst_6 : f32 to vector<8x256xf32>
    %8 = arith.maximumf %6, %7 : vector<8x256xf32>
    %c0_7 = arith.constant 0 : index
    %c0_8 = arith.constant 0 : index
    %c0_9 = arith.constant 0 : index
    %9 = vector.load %arg5[%c0_7, %c0_8, %c0_9] : memref<1x8x256xf32, #tpu.memory_space<vmem>>, vector<1x8x256xf32>
    %10 = vector.shape_cast %9 : vector<1x8x256xf32> to vector<8x256xf32>
    %11 = vector.shape_cast %8 : vector<8x256xf32> to vector<1x8x256xf32>
    tpu.vector_store %arg5[%c0_7, %c0_8, %c0_9], %11 {strides = array<i32>} : memref<1x8x256xf32, #tpu.memory_space<vmem>>, vector<1x8x256xf32>,
    return
  }
  func.func @transform_0(%arg0: i32, %arg1: i32) -> (i32, i32, i32) {
    %c0_i32 = arith.constant 0 : i32
    %c0_i32_0 = arith.constant 0 : i32
    return %arg0, %c0_i32, %arg1 : i32, i32, i32
  }
  func.func @transform_1(%arg0: i32, %arg1: i32) -> (i32, i32) {
    %c0_i32 = arith.constant 0 : i32
    %c0_i32_0 = arith.constant 0 : i32
    %c0_i32_1 = arith.constant 0 : i32
    return %c0_i32, %c0_i32_0 : i32, i32
  }
  func.func @transform_2(%arg0: i32, %arg1: i32) -> (i32, i32) {
    %c0_i32 = arith.constant 0 : i32
    %c0_i32_0 = arith.constant 0 : i32
    %c0_i32_1 = arith.constant 0 : i32
    return %c0_i32, %c0_i32_0 : i32, i32
  }
  func.func @transform_3(%arg0: i32, %arg1: i32) -> (i32, i32, i32) {
    %c0_i32 = arith.constant 0 : i32
    %c0_i32_0 = arith.constant 0 : i32
    return %arg0, %c0_i32, %arg1 : i32, i32, i32
  }
}

</mosaic_0001>

<llo_original>
// kernel: band_expansion.2
$region0: #{band_expansion.2}
  #allocation0 [shape = 'u32[]', space=smem, size = 0x4, offset = 0x4, fixed_abs, tag = 'smem constant byte address 0x4 - core index']
  #allocation1 [shape = 'u32[144,128]{1,0:T(1,128)}', space=vmem, size = 0x12000, scoped, tag = 'internal scratch']
  #allocation2 [shape = 'f32[8,1]{1,0:T(8,128)}', space=vmem, size = 0x1000, scoped, tag = 'scratch operand']
  #allocation3 [shape = 'f32[8,1]{1,0:T(8,128)}', space=vmem, size = 0x1000, scoped, tag = 'scratch operand']
  %s0 = inlined_call_operand.vmem [shape: f32[2,4,256], index: 0, kind: input, shape index: {}]
  %s1 = inlined_call_operand.vmem [shape: f32[8,4], index: 1, kind: input, shape index: {}]
  %s2 = inlined_call_operand.vmem [shape: f32[2,8,1], index: 2, kind: output, shape index: {0}]
  %s3 = inlined_call_operand.vmem [shape: f32[2,8,1], index: 3, kind: output, shape index: {1}]
  %4 = xla_tuple %s2, %s3
  %s5 = sld [smem:[#allocation0]]
  $region57: #{band_expansion.2} parent=0
    _
  %s7 = ssub.s32 1, %s5
  %s8 = scalar_select 0, %s7, %s5
  loop: start=0, step=1, limit=4
  $region2: #{band_expansion.2} parent=0 // loop_pre_header
    _
  $region3: #{band_expansion.2} parent=0 // loop_header
    %s10 = sphi 0, %s14
    %p11 = scmp.ge.s32.totalorder %s10, 4
    %s17 = sphi 0, %s29
    %s18 = sphi 0, %s25
    %s19 = sphi 0, %s17
    %s20 = sphi 0, %s18
    %s21 = sphi 0, %s19
    %s22 = sphi 0, %s20
    %s34 = sphi 0, %s36
    %s37 = sphi 0, %s34
    %s38 = sphi 0, %s37
    %s54 = sphi 0, %s38
    %s58 = sphi 0, %s58
    %s60 = sphi 0, %s58
    %s61 = sphi 0, %s60
    %s75 = sphi 0, %s61
    %s81 = sphi 0, %s83
    %s84 = sphi 0, %s81
    %s85 = sphi 0, %s84
    %s101 = sphi 0, %s85
    %s107 = sphi 0, %s109
    %s110 = sphi 0, %s107
    %s111 = sphi 0, %s110
    %s127 = sphi 0, %s111
  $region4: #{band_expansion.2} parent=0 // loop_header_branch
    %13 = sbr.rel (%p11) target = $region8
  $region5: #{band_expansion.2} parent=0 // loop_body
    %s15 = ssub.s32 %s10, 1
    %s16 = ssub.s32 %s10, 2
    %s23 = sadd.s32 1, %s18
    %p24 = scmp.ge.s32.totalorder %s23, 1
    %s25 = scalar_select %p24, 0, %s23
    %s26 = sadd.s32 1, %s17
    %s27 = scalar_select %p24, %s26, %s17
    %p28 = scmp.ge.s32.totalorder %s27, 2
    %s29 = scalar_select %p28, 0, %s27
    %s30 = ssub.s32 %s17, %s29
    %s31 = ssub.s32 %s18, %s25
    %s32 = sor.u32 %s30, %s31
    %p33 = scmp.eq.s32.totalorder %s32, 0
    %s35 = sadd.s32 %s34, 1
    %s36 = scalar_select %p33, %s34, %s35
    %p39 = pneg %p33
    %p40 = scmp.eq.s32.totalorder %s10, 1
    %p41 = por %p39, %p40
    %p42 = scmp.ne.s32.totalorder %s34, %s37
    %p43 = scmp.eq.s32.totalorder %s10, 0
    %p44 = por %p42, %p43
    %p45 = scmp.ne.s32.totalorder %s34, %s37
    %p46 = scmp.eq.s32.totalorder %s15, 1
    %p47 = por %p45, %p46
    %p48 = scmp.ne.s32.totalorder %s37, %s38
    %p49 = scmp.eq.s32.totalorder %s15, 0
    %p50 = por %p48, %p49
    %p51 = scmp.ne.s32.totalorder %s37, %s38
    %p52 = scmp.eq.s32.totalorder %s16, 1
    %p53 = por %p51, %p52
    %p55 = scmp.ne.s32.totalorder %s38, %s54
    %p56 = scmp.eq.s32.totalorder %s16, 0
    %p57 = por %p55, %p56
    %s59 = sadd.s32 %s58, 1
    %p62 = scmp.eq.s32.totalorder %s10, 1
    %p63 = scmp.ne.s32.totalorder %s58, %s60
    %p64 = scmp.eq.s32.totalorder %s10, 0
    %p65 = por %p63, %p64
    %p66 = scmp.ne.s32.totalorder %s58, %s60
    %p67 = scmp.eq.s32.totalorder %s15, 1
    %p68 = por %p66, %p67
    %p69 = scmp.ne.s32.totalorder %s60, %s61
    %p70 = scmp.eq.s32.totalorder %s15, 0
    %p71 = por %p69, %p70
    %p72 = scmp.ne.s32.totalorder %s60, %s61
    %p73 = scmp.eq.s32.totalorder %s16, 1
    %p74 = por %p72, %p73
    %p76 = scmp.ne.s32.totalorder %s61, %s75
    %p77 = scmp.eq.s32.totalorder %s16, 0
    %p78 = por %p76, %p77
    %s79 = ssub.s32 %s17, %s29
    %p80 = scmp.eq.s32.totalorder %s79, 0
    %s82 = sadd.s32 %s81, 1
    %s83 = scalar_select %p80, %s81, %s82
    %p86 = pneg %p80
    %p87 = scmp.eq.s32.totalorder %s10, 1
    %p88 = por %p86, %p87
    %p89 = scmp.ne.s32.totalorder %s81, %s84
    %p90 = scmp.eq.s32.totalorder %s10, 0
    %p91 = por %p89, %p90
    %p92 = scmp.ne.s32.totalorder %s81, %s84
    %p93 = scmp.eq.s32.totalorder %s15, 1
    %p94 = por %p92, %p93
    %p95 = scmp.ne.s32.totalorder %s84, %s85
    %p96 = scmp.eq.s32.totalorder %s15, 0
    %p97 = por %p95, %p96
    %p98 = scmp.ne.s32.totalorder %s84, %s85
    %p99 = scmp.eq.s32.totalorder %s16, 1
    %p100 = por %p98, %p99
    %p102 = scmp.ne.s32.totalorder %s85, %s101
    %p103 = scmp.eq.s32.totalorder %s16, 0
    %p104 = por %p102, %p103
    %s105 = ssub.s32 %s17, %s29
    %p106 = scmp.eq.s32.totalorder %s105, 0
    %s108 = sadd.s32 %s107, 1
    %s109 = scalar_select %p106, %s107, %s108
    %p112 = pneg %p106
    %p113 = scmp.eq.s32.totalorder %s10, 1
    %p114 = por %p112, %p113
    %p115 = scmp.ne.s32.totalorder %s107, %s110
    %p116 = scmp.eq.s32.totalorder %s10, 0
    %p117 = por %p115, %p116
    %p118 = scmp.ne.s32.totalorder %s107, %s110
    %p119 = scmp.eq.s32.totalorder %s15, 1
    %p120 = por %p118, %p119
    %p121 = scmp.ne.s32.totalorder %s110, %s111
    %p122 = scmp.eq.s32.totalorder %s15, 0
    %p123 = por %p121, %p122
    %p124 = scmp.ne.s32.totalorder %s110, %s111
    %p125 = scmp.eq.s32.totalorder %s16, 1
    %p126 = por %p124, %p125
    %p128 = scmp.ne.s32.totalorder %s111, %s127
    %p129 = scmp.eq.s32.totalorder %s16, 0
    %p130 = por %p128, %p129
    %p131 = scmp.le.s32.totalorder 1, %s10
    %p132 = scmp.lt.s32.totalorder %s10, 3
    %p133 = pnand %p131, %p132
    %p134 = pneg %p133
    // Predicated region
    $region9: #{band_expansion.2} parent=5 // pred_check
      _
    $region10: #{band_expansion.2} parent=5 // pred_check_branch
      %136 = sbr.rel (%p133) target = $region12
    $region11: #{band_expansion.2} parent=5 // pred_region
      %s137 = ssub.s32 %s10, 1
      // Predicated region
      $region13: #{band_expansion.2} parent=11 // pred_check
        %p138 = pneg %p71
      $region14: #{band_expansion.2} parent=11 // pred_check_branch
        %140 = sbr.rel (%p138) target = $region16
      $region15: #{band_expansion.2} parent=11 // pred_region
        _
      $region16: #{band_expansion.2} parent=11 // pred_fallthru
        _
    $region12: #{band_expansion.2} parent=5 // pred_fallthru
      _
    %p141 = scmp.lt.s32.totalorder %s10, 2
    // Predicated region
    $region17: #{band_expansion.2} parent=5 // pred_check
      %p142 = pneg %p141
    $region18: #{band_expansion.2} parent=5 // pred_check_branch
      %144 = sbr.rel (%p142) target = $region20
    $region19: #{band_expansion.2} parent=5 // pred_region
      // Predicated region
      $region21: #{band_expansion.2} parent=19 // pred_check
        %p145 = pneg %p44
      $region22: #{band_expansion.2} parent=19 // pred_check_branch
        %147 = sbr.rel (%p145) target = $region24
      $region23: #{band_expansion.2} parent=19 // pred_region
        %s148 = smul.u32 2, %s18
        %p149 = scmp.lt.s32.totalorder %s17, 1
        %s150 = scalar_select %p149, %s17, 1
        %p151 = scmp.lt.s32.totalorder %s148, 1
        %s152 = scalar_select %p151, %s148, 1
        %s153 = smul.addr %s150, 2
        %s154 = sadd.s32 %s152, %s153
        %s155 = smul.addr %s154, 4
        %s156 = scalar_lea.vmem %s0, %s155
        %s157 = smul.u32 2, %s18
      $region24: #{band_expansion.2} parent=19 // pred_fallthru
        _
    $region20: #{band_expansion.2} parent=5 // pred_fallthru
      _
    %p158 = scmp.le.s32.totalorder 1, %s10
    %p159 = scmp.lt.s32.totalorder %s10, 3
    %p160 = pnand %p158, %p159
    %p161 = pneg %p160
    // Predicated region
    $region25: #{band_expansion.2} parent=5 // pred_check
      _
    $region26: #{band_expansion.2} parent=5 // pred_check_branch
      %163 = sbr.rel (%p160) target = $region28
    $region27: #{band_expansion.2} parent=5 // pred_region
      %s164 = ssub.s32 %s10, 1
      %s165 = smul.u32 2, %s20
      %p166 = scmp.lt.s32.totalorder %s19, 1
      %s167 = scalar_select %p166, %s19, 1
      %p168 = scmp.lt.s32.totalorder %s165, 1
      %s169 = scalar_select %p168, %s165, 1
      %s170 = smul.addr %s167, 2
      %s171 = sadd.s32 %s169, %s170
      %s172 = smul.addr %s171, 4
      %s173 = scalar_lea.vmem %s0, %s172
      %p174 = pneg %p50
      %p175 = pneg %p47
      %p176 = pneg %p71
      %p177 = pneg %p68
      %p178 = pneg %p97
      %p179 = pneg %p94
      %p180 = scmp.lt.s32.totalorder %s19, 1
      %s181 = scalar_select %p180, %s19, 1
      %s182 = smul.addr %s181, 8
      %s183 = scalar_lea.vmem %s2, %s182
      %p184 = pneg %p123
      %p185 = pneg %p120
      %p186 = scmp.lt.s32.totalorder %s19, 1
      %s187 = scalar_select %p186, %s19, 1
      %s188 = smul.addr %s187, 8
      %s189 = scalar_lea.vmem %s3, %s188
      %s190 = smul.u32 2, %s20
      %p191 = scmp.lt.s32.totalorder %s19, 1
      %s192 = scalar_select %p191, %s19, 1
      %p193 = scmp.lt.s32.totalorder %s190, 1
      %s194 = scalar_select %p193, %s190, 1
      %s195 = smul.addr %s192, 2
      %s196 = sadd.s32 %s194, %s195
      %s197 = smul.addr %s196, 4
      %s198 = scalar_lea.vmem %s0, %s197
      %s199 = smul.u32 2, %s20
      %p200 = scmp.lt.s32.totalorder %s19, 1
      %s201 = scalar_select %p200, %s19, 1
      %s202 = smul.addr %s201, 8
      %s203 = scalar_lea.vmem %s2, %s202
      %p204 = scmp.lt.s32.totalorder %s19, 1
      %s205 = scalar_select %p204, %s19, 1
      %s206 = smul.addr %s205, 8
      %s207 = scalar_lea.vmem %s3, %s206
      %p208 = scmp.eq.s32.totalorder %s20, 0
      // Predicated region
      $region29: #{band_expansion.2} parent=27 // pred_check
        %p209 = pneg %p208
      $region30: #{band_expansion.2} parent=27 // pred_check_branch
        %211 = sbr.rel (%p209) target = $region32
      $region31: #{band_expansion.2} parent=27 // pred_region
        %vm212 = vcmask 7168
        %213 = vst.msk [vmem:[#allocation2] sm:$0xff] %vm212, 0.0
        %214 = vst.msk [vmem:[#allocation3] sm:$0xff] %vm212, 0.0
      $region32: #{band_expansion.2} parent=27 // pred_fallthru
        _
      %v215 = vld [vmem:[%s198] sm:$0xff]
      %v216 = vld [vmem:[%s1] sm:$0xff]
      %v218 = vcombine.high %v215, %v215
      %vm219 = vcmask 31744
      %v221 = vsel %vm219, %v216, 0
      %vm223 = vcmask 1043456
      %v224 = vsel %vm223, %v215, 0
      %v226 = vsel %vm223, %v218, 0
      %228 = vmatprep.subr.mxu0 %v226
      %229 = vmatpush1.msra.mxu0 %v224
      %230 = vmatprep.subr.mxu0 0.0
      %231 = vmatpush1.msra.mxu0 0.0
      %232 = vmatprep.subr.mxu0 0.0
      %233 = vmatpush1.msra.mxu0 0.0
      %234 = vmatprep.subr.mxu0 0.0
      %235 = vmatpush1.msra.mxu0 0.0
      %236 = vmatprep.subr.mxu0 0.0
      %237 = vmatpush1.msra.mxu0 0.0
      %238 = vmatprep.subr.mxu0 0.0
      %239 = vmatpush1.msra.mxu0 0.0
      %240 = vmatprep.subr.mxu0 0.0
      %241 = vmatpush1.msra.mxu0 0.0
      %242 = vmatprep.subr.mxu0 0.0
      %243 = vmatpush1.msra.mxu0 0.0
      %244 = vmatprep.subr.mxu0 0.0
      %245 = vmatpush1.msra.mxu0 0.0
      %246 = vmatprep.subr.mxu0 0.0
      %247 = vmatpush1.msra.mxu0 0.0
      %248 = vmatprep.subr.mxu0 0.0
      %249 = vmatpush1.msra.mxu0 0.0
      %250 = vmatprep.subr.mxu0 0.0
      %251 = vmatpush1.msra.mxu0 0.0
      %252 = vmatprep.subr.mxu0 0.0
      %253 = vmatpush1.msra.mxu0 0.0
      %254 = vmatprep.subr.mxu0 0.0
      %255 = vmatpush1.msra.mxu0 0.0
      %256 = vmatprep.subr.mxu0 0.0
      %257 = vmatpush1.msra.mxu0 0.0
      %258 = vmatprep.subr.mxu0 0.0
      %259 = vmatpush1.msra.mxu0 0.0
      %260 = vmatprep.subr.mxu0 0.0
      %261 = vmatpush1.msra.mxu0 0.0
      %262 = vmatprep.subr.mxu0 0.0
      %263 = vmatpush1.msra.mxu0 0.0
      %264 = vmatprep.subr.mxu0 0.0
      %265 = vmatpush1.msra.mxu0 0.0
      %266 = vmatprep.subr.mxu0 0.0
      %267 = vmatpush1.msra.mxu0 0.0
      %268 = vmatprep.subr.mxu0 0.0
      %269 = vmatpush1.msra.mxu0 0.0
      %270 = vmatprep.subr.mxu0 0.0
      %271 = vmatpush1.msra.mxu0 0.0
      %272 = vmatprep.subr.mxu0 0.0
      %273 = vmatpush1.msra.mxu0 0.0
      %274 = vmatprep.subr.mxu0 0.0
      %275 = vmatpush1.msra.mxu0 0.0
      %276 = vmatprep.subr.mxu0 0.0
      %277 = vmatpush1.msra.mxu0 0.0
      %278 = vmatprep.subr.mxu0 0.0
      %279 = vmatpush1.msra.mxu0 0.0
      %280 = vmatprep.subr.mxu0 0.0
      %281 = vmatpush1.msra.mxu0 0.0
      %282 = vmatprep.subr.mxu0 0.0
      %283 = vmatpush1.msra.mxu0 0.0
      %284 = vmatprep.subr.mxu0 0.0
      %285 = vmatpush1.msra.mxu0 0.0
      %286 = vmatprep.subr.mxu0 0.0
      %287 = vmatpush1.msra.mxu0 0.0
      %288 = vmatprep.subr.mxu0 0.0
      %289 = vmatpush1.msra.mxu0 0.0
      %290 = vmatprep.subr.mxu0 0.0
      %291 = vmatpush1.msra.mxu0 0.0
      %292 = vmatprep.mubr.f32.mxu0 0.0
      %293 = vmatmul.mubr.f32.gmra.mrb[0].mxu0 %v221
      %v294 = vpop.f32.mrb[0].mxu0
      %v295 = vadd.f32 0.0, %v294
      %v296 = vpop.f32.mrb[0].mxu0
      %v297 = vadd.f32 0.0, %v296
      %298 = vdwg.mxu0
      %v299 = vld [vmem:[#allocation2] sm:$0xff]
      %v300 = vadd.f32 %v295, %v297
      %301 = vadd.xlane.f32.xlu0 %v300
      %v302 = vpop.xlane.xlu0 %301
      %v303 = vadd.f32 %v299, %v302
      %vm304 = vcmask 7168
      %305 = vst.msk [vmem:[#allocation2] sm:$0xff] %vm304, %v303
      %v306 = vld [vmem:[#allocation3] sm:$0xff]
      %v307 = vmul.f32 %v295, %v295
      %v308 = vmul.f32 %v297, %v297
      %v309 = vadd.f32 %v307, %v308
      %310 = vadd.xlane.f32.xlu0 %v309
      %v311 = vpop.xlane.xlu0 %310
      %v312 = vadd.f32 %v306, %v311
      %313 = vst.msk [vmem:[#allocation3] sm:$0xff] %vm304, %v312
      // Predicated region
      $region33: #{band_expansion.2} parent=27 // pred_check
        %p314 = pneg %p208
      $region34: #{band_expansion.2} parent=27 // pred_check_branch
        %316 = sbr.rel (%p314) target = $region36
      $region35: #{band_expansion.2} parent=27 // pred_region
        %v317 = vld [vmem:[#allocation2] sm:$0xff]
        %318 = vst.msk [vmem:[%s203] sm:$0xff] %vm304, %v317
        %v319 = vld [vmem:[#allocation3] sm:$0xff]
        %320 = vst.msk [vmem:[%s207] sm:$0xff] %vm304, %v319
      $region36: #{band_expansion.2} parent=27 // pred_fallthru
        _
      %p321 = scmp.lt.s32.totalorder %s19, 1
      %s322 = scalar_select %p321, %s19, 1
      %s323 = smul.addr %s322, 8
      %s324 = scalar_lea.vmem %s2, %s323
      %p325 = scmp.lt.s32.totalorder %s19, 1
      %s326 = scalar_select %p325, %s19, 1
      %s327 = smul.addr %s326, 8
      %s328 = scalar_lea.vmem %s3, %s327
      // Predicated region
      $region37: #{band_expansion.2} parent=27 // pred_check
        %p329 = pneg %p94
      $region38: #{band_expansion.2} parent=27 // pred_check_branch
        %331 = sbr.rel (%p329) target = $region40
      $region39: #{band_expansion.2} parent=27 // pred_region
        _
      $region40: #{band_expansion.2} parent=27 // pred_fallthru
        _
      // Predicated region
      $region41: #{band_expansion.2} parent=27 // pred_check
        %p332 = pneg %p120
      $region42: #{band_expansion.2} parent=27 // pred_check_branch
        %334 = sbr.rel (%p332) target = $region44
      $region43: #{band_expansion.2} parent=27 // pred_region
        _
      $region44: #{band_expansion.2} parent=27 // pred_fallthru
        _
    $region28: #{band_expansion.2} parent=5 // pred_fallthru
      _
    %p335 = scmp.le.s32.totalorder 2, %s10
    // Predicated region
    $region45: #{band_expansion.2} parent=5 // pred_check
      %p336 = pneg %p335
    $region46: #{band_expansion.2} parent=5 // pred_check_branch
      %338 = sbr.rel (%p336) target = $region48
    $region47: #{band_expansion.2} parent=5 // pred_region
      %s339 = ssub.s32 %s10, 2
      // Predicated region
      $region49: #{band_expansion.2} parent=47 // pred_check
        %p340 = pneg %p100
      $region50: #{band_expansion.2} parent=47 // pred_check_branch
        %342 = sbr.rel (%p340) target = $region52
      $region51: #{band_expansion.2} parent=47 // pred_region
        %p343 = scmp.lt.s32.totalorder %s21, 1
        %s344 = scalar_select %p343, %s21, 1
        %s345 = smul.addr %s344, 8
        %s346 = scalar_lea.vmem %s2, %s345
      $region52: #{band_expansion.2} parent=47 // pred_fallthru
        _
      // Predicated region
      $region53: #{band_expansion.2} parent=47 // pred_check
        %p347 = pneg %p126
      $region54: #{band_expansion.2} parent=47 // pred_check_branch
        %349 = sbr.rel (%p347) target = $region56
      $region55: #{band_expansion.2} parent=47 // pred_region
        %p350 = scmp.lt.s32.totalorder %s21, 1
        %s351 = scalar_select %p350, %s21, 1
        %s352 = smul.addr %s351, 8
        %s353 = scalar_lea.vmem %s3, %s352
      $region56: #{band_expansion.2} parent=47 // pred_fallthru
        _
    $region48: #{band_expansion.2} parent=5 // pred_fallthru
      _
  $region6: #{band_expansion.2} parent=0 // loop_footer
    %s14 = sadd.s32 1, %s10
  $region7: #{band_expansion.2} parent=0 // loop_footer_branch
    %9 = sbr.rel target = $region3
  $region8: #{band_expansion.2} parent=0 // loop_exit
    _

// kernel: band_expansion.3
$region0: #{band_expansion.3}
  #allocation0 [shape = 'u32[]', space=smem, size = 0x4, offset = 0x4, fixed_abs, tag = 'smem constant byte address 0x4 - core index']
  #allocation1 [shape = 'u32[144,128]{1,0:T(1,128)}', space=vmem, size = 0x12000, scoped, tag = 'internal scratch']
  %s0 = inlined_call_operand.vmem [shape: f32[2,4,256], index: 0, kind: input, shape index: {}]
  %s1 = inlined_call_operand.vmem [shape: f32[8,4], index: 1, kind: input, shape index: {}]
  %s2 = inlined_call_operand.vmem [shape: f32[8,1], index: 2, kind: input, shape index: {}]
  %s3 = inlined_call_operand.vmem [shape: f32[2,8,256], index: 3, kind: output, shape index: {}]
  %s4 = sld [smem:[#allocation0]]
  $region45: #{band_expansion.3} parent=0
    _
  %s6 = ssub.s32 1, %s4
  %s7 = scalar_select 0, %s6, %s4
  loop: start=0, step=1, limit=4
  $region2: #{band_expansion.3} parent=0 // loop_pre_header
    _
  $region3: #{band_expansion.3} parent=0 // loop_header
    %s9 = sphi 0, %s13
    %p10 = scmp.ge.s32.totalorder %s9, 4
    %s16 = sphi 0, %s28
    %s17 = sphi 0, %s24
    %s18 = sphi 0, %s16
    %s19 = sphi 0, %s17
    %s20 = sphi 0, %s18
    %s21 = sphi 0, %s19
    %s33 = sphi 0, %s35
    %s36 = sphi 0, %s33
    %s37 = sphi 0, %s36
    %s53 = sphi 0, %s37
    %s57 = sphi 0, %s57
    %s59 = sphi 0, %s57
    %s60 = sphi 0, %s59
    %s74 = sphi 0, %s60
    %s78 = sphi 0, %s78
    %s80 = sphi 0, %s78
    %s81 = sphi 0, %s80
    %s95 = sphi 0, %s81
    %s103 = sphi 0, %s105
    %s106 = sphi 0, %s103
    %s107 = sphi 0, %s106
    %s123 = sphi 0, %s107
  $region4: #{band_expansion.3} parent=0 // loop_header_branch
    %12 = sbr.rel (%p10) target = $region8
  $region5: #{band_expansion.3} parent=0 // loop_body
    %s14 = ssub.s32 %s9, 1
    %s15 = ssub.s32 %s9, 2
    %s22 = sadd.s32 1, %s17
    %p23 = scmp.ge.s32.totalorder %s22, 1
    %s24 = scalar_select %p23, 0, %s22
    %s25 = sadd.s32 1, %s16
    %s26 = scalar_select %p23, %s25, %s16
    %p27 = scmp.ge.s32.totalorder %s26, 2
    %s28 = scalar_select %p27, 0, %s26
    %s29 = ssub.s32 %s16, %s28
    %s30 = ssub.s32 %s17, %s24
    %s31 = sor.u32 %s29, %s30
    %p32 = scmp.eq.s32.totalorder %s31, 0
    %s34 = sadd.s32 %s33, 1
    %s35 = scalar_select %p32, %s33, %s34
    %p38 = pneg %p32
    %p39 = scmp.eq.s32.totalorder %s9, 1
    %p40 = por %p38, %p39
    %p41 = scmp.ne.s32.totalorder %s33, %s36
    %p42 = scmp.eq.s32.totalorder %s9, 0
    %p43 = por %p41, %p42
    %p44 = scmp.ne.s32.totalorder %s33, %s36
    %p45 = scmp.eq.s32.totalorder %s14, 1
    %p46 = por %p44, %p45
    %p47 = scmp.ne.s32.totalorder %s36, %s37
    %p48 = scmp.eq.s32.totalorder %s14, 0
    %p49 = por %p47, %p48
    %p50 = scmp.ne.s32.totalorder %s36, %s37
    %p51 = scmp.eq.s32.totalorder %s15, 1
    %p52 = por %p50, %p51
    %p54 = scmp.ne.s32.totalorder %s37, %s53
    %p55 = scmp.eq.s32.totalorder %s15, 0
    %p56 = por %p54, %p55
    %s58 = sadd.s32 %s57, 1
    %p61 = scmp.eq.s32.totalorder %s9, 1
    %p62 = scmp.ne.s32.totalorder %s57, %s59
    %p63 = scmp.eq.s32.totalorder %s9, 0
    %p64 = por %p62, %p63
    %p65 = scmp.ne.s32.totalorder %s57, %s59
    %p66 = scmp.eq.s32.totalorder %s14, 1
    %p67 = por %p65, %p66
    %p68 = scmp.ne.s32.totalorder %s59, %s60
    %p69 = scmp.eq.s32.totalorder %s14, 0
    %p70 = por %p68, %p69
    %p71 = scmp.ne.s32.totalorder %s59, %s60
    %p72 = scmp.eq.s32.totalorder %s15, 1
    %p73 = por %p71, %p72
    %p75 = scmp.ne.s32.totalorder %s60, %s74
    %p76 = scmp.eq.s32.totalorder %s15, 0
    %p77 = por %p75, %p76
    %s79 = sadd.s32 %s78, 1
    %p82 = scmp.eq.s32.totalorder %s9, 1
    %p83 = scmp.ne.s32.totalorder %s78, %s80
    %p84 = scmp.eq.s32.totalorder %s9, 0
    %p85 = por %p83, %p84
    %p86 = scmp.ne.s32.totalorder %s78, %s80
    %p87 = scmp.eq.s32.totalorder %s14, 1
    %p88 = por %p86, %p87
    %p89 = scmp.ne.s32.totalorder %s80, %s81
    %p90 = scmp.eq.s32.totalorder %s14, 0
    %p91 = por %p89, %p90
    %p92 = scmp.ne.s32.totalorder %s80, %s81
    %p93 = scmp.eq.s32.totalorder %s15, 1
    %p94 = por %p92, %p93
    %p96 = scmp.ne.s32.totalorder %s81, %s95
    %p97 = scmp.eq.s32.totalorder %s15, 0
    %p98 = por %p96, %p97
    %s99 = ssub.s32 %s16, %s28
    %s100 = ssub.s32 %s17, %s24
    %s101 = sor.u32 %s99, %s100
    %p102 = scmp.eq.s32.totalorder %s101, 0
    %s104 = sadd.s32 %s103, 1
    %s105 = scalar_select %p102, %s103, %s104
    %p108 = pneg %p102
    %p109 = scmp.eq.s32.totalorder %s9, 1
    %p110 = por %p108, %p109
    %p111 = scmp.ne.s32.totalorder %s103, %s106
    %p112 = scmp.eq.s32.totalorder %s9, 0
    %p113 = por %p111, %p112
    %p114 = scmp.ne.s32.totalorder %s103, %s106
    %p115 = scmp.eq.s32.totalorder %s14, 1
    %p116 = por %p114, %p115
    %p117 = scmp.ne.s32.totalorder %s106, %s107
    %p118 = scmp.eq.s32.totalorder %s14, 0
    %p119 = por %p117, %p118
    %p120 = scmp.ne.s32.totalorder %s106, %s107
    %p121 = scmp.eq.s32.totalorder %s15, 1
    %p122 = por %p120, %p121
    %p124 = scmp.ne.s32.totalorder %s107, %s123
    %p125 = scmp.eq.s32.totalorder %s15, 0
    %p126 = por %p124, %p125
    %p127 = scmp.le.s32.totalorder 1, %s9
    %p128 = scmp.lt.s32.totalorder %s9, 3
    %p129 = pnand %p127, %p128
    %p130 = pneg %p129
    // Predicated region
    $region9: #{band_expansion.3} parent=5 // pred_check
      _
    $region10: #{band_expansion.3} parent=5 // pred_check_branch
      %132 = sbr.rel (%p129) target = $region12
    $region11: #{band_expansion.3} parent=5 // pred_region
      %s133 = ssub.s32 %s9, 1
      // Predicated region
      $region13: #{band_expansion.3} parent=11 // pred_check
        %p134 = pneg %p70
      $region14: #{band_expansion.3} parent=11 // pred_check_branch
        %136 = sbr.rel (%p134) target = $region16
      $region15: #{band_expansion.3} parent=11 // pred_region
        _
      $region16: #{band_expansion.3} parent=11 // pred_fallthru
        _
      // Predicated region
      $region17: #{band_expansion.3} parent=11 // pred_check
        %p137 = pneg %p91
      $region18: #{band_expansion.3} parent=11 // pred_check_branch
        %139 = sbr.rel (%p137) target = $region20
      $region19: #{band_expansion.3} parent=11 // pred_region
        _
      $region20: #{band_expansion.3} parent=11 // pred_fallthru
        _
    $region12: #{band_expansion.3} parent=5 // pred_fallthru
      _
    %p140 = scmp.lt.s32.totalorder %s9, 2
    // Predicated region
    $region21: #{band_expansion.3} parent=5 // pred_check
      %p141 = pneg %p140
    $region22: #{band_expansion.3} parent=5 // pred_check_branch
      %143 = sbr.rel (%p141) target = $region24
    $region23: #{band_expansion.3} parent=5 // pred_region
      // Predicated region
      $region25: #{band_expansion.3} parent=23 // pred_check
        %p144 = pneg %p43
      $region26: #{band_expansion.3} parent=23 // pred_check_branch
        %146 = sbr.rel (%p144) target = $region28
      $region27: #{band_expansion.3} parent=23 // pred_region
        %s147 = smul.u32 2, %s17
        %p148 = scmp.lt.s32.totalorder %s16, 1
        %s149 = scalar_select %p148, %s16, 1
        %p150 = scmp.lt.s32.totalorder %s147, 1
        %s151 = scalar_select %p150, %s147, 1
        %s152 = smul.addr %s149, 2
        %s153 = sadd.s32 %s151, %s152
        %s154 = smul.addr %s153, 4
        %s155 = scalar_lea.vmem %s0, %s154
        %s156 = smul.u32 2, %s17
      $region28: #{band_expansion.3} parent=23 // pred_fallthru
        _
    $region24: #{band_expansion.3} parent=5 // pred_fallthru
      _
    %p157 = scmp.le.s32.totalorder 1, %s9
    %p158 = scmp.lt.s32.totalorder %s9, 3
    %p159 = pnand %p157, %p158
    %p160 = pneg %p159
    // Predicated region
    $region29: #{band_expansion.3} parent=5 // pred_check
      _
    $region30: #{band_expansion.3} parent=5 // pred_check_branch
      %162 = sbr.rel (%p159) target = $region32
    $region31: #{band_expansion.3} parent=5 // pred_region
      %s163 = ssub.s32 %s9, 1
      %s164 = smul.u32 2, %s19
      %p165 = scmp.lt.s32.totalorder %s18, 1
      %s166 = scalar_select %p165, %s18, 1
      %p167 = scmp.lt.s32.totalorder %s164, 1
      %s168 = scalar_select %p167, %s164, 1
      %s169 = smul.addr %s166, 2
      %s170 = sadd.s32 %s168, %s169
      %s171 = smul.addr %s170, 4
      %s172 = scalar_lea.vmem %s0, %s171
      %p173 = pneg %p49
      %p174 = pneg %p46
      %p175 = pneg %p70
      %p176 = pneg %p67
      %p177 = pneg %p91
      %p178 = pneg %p88
      %p179 = pneg %p119
      %p180 = pneg %p116
      %s181 = smul.u32 2, %s19
      %p182 = scmp.lt.s32.totalorder %s18, 1
      %s183 = scalar_select %p182, %s18, 1
      %p184 = scmp.lt.s32.totalorder %s181, 1
      %s185 = scalar_select %p184, %s181, 1
      %s186 = smul.addr %s183, 2
      %s187 = sadd.s32 %s185, %s186
      %s188 = smul.addr %s187, 8
      %s189 = scalar_lea.vmem %s3, %s188
      %s190 = smul.u32 2, %s19
      %p191 = scmp.lt.s32.totalorder %s18, 1
      %s192 = scalar_select %p191, %s18, 1
      %p193 = scmp.lt.s32.totalorder %s190, 1
      %s194 = scalar_select %p193, %s190, 1
      %s195 = smul.addr %s192, 2
      %s196 = sadd.s32 %s194, %s195
      %s197 = smul.addr %s196, 4
      %s198 = scalar_lea.vmem %s0, %s197
      %s199 = smul.u32 2, %s19
      %s200 = smul.u32 2, %s19
      %p201 = scmp.lt.s32.totalorder %s18, 1
      %s202 = scalar_select %p201, %s18, 1
      %p203 = scmp.lt.s32.totalorder %s200, 1
      %s204 = scalar_select %p203, %s200, 1
      %s205 = smul.addr %s202, 2
      %s206 = sadd.s32 %s204, %s205
      %s207 = smul.addr %s206, 8
      %s208 = scalar_lea.vmem %s3, %s207
      %s209 = smul.u32 2, %s19
      %v210 = vld [vmem:[%s198] sm:$0xff]
      %v211 = vld [vmem:[%s1] sm:$0xff]
      %v212 = vld [vmem:[%s2] sm:$0xff]
      %214 = vset.pattern.permute.xlu0 0
      %215 = vperm.xlu0 %214, %v212
      %v216 = vpop.permute.xlu0 %215
      %v219 = vcombine.high %v210, %v210
      %vm220 = vcmask 31744
      %v222 = vsel %vm220, %v211, 0
      %vm224 = vcmask 1043456
      %v225 = vsel %vm224, %v210, 0
      %v227 = vsel %vm224, %v219, 0
      %229 = vmatprep.subr.mxu0 %v227
      %230 = vmatpush1.msra.mxu0 %v225
      %231 = vmatprep.subr.mxu0 0.0
      %232 = vmatpush1.msra.mxu0 0.0
      %233 = vmatprep.subr.mxu0 0.0
      %234 = vmatpush1.msra.mxu0 0.0
      %235 = vmatprep.subr.mxu0 0.0
      %236 = vmatpush1.msra.mxu0 0.0
      %237 = vmatprep.subr.mxu0 0.0
      %238 = vmatpush1.msra.mxu0 0.0
      %239 = vmatprep.subr.mxu0 0.0
      %240 = vmatpush1.msra.mxu0 0.0
      %241 = vmatprep.subr.mxu0 0.0
      %242 = vmatpush1.msra.mxu0 0.0
      %243 = vmatprep.subr.mxu0 0.0
      %244 = vmatpush1.msra.mxu0 0.0
      %245 = vmatprep.subr.mxu0 0.0
      %246 = vmatpush1.msra.mxu0 0.0
      %247 = vmatprep.subr.mxu0 0.0
      %248 = vmatpush1.msra.mxu0 0.0
      %249 = vmatprep.subr.mxu0 0.0
      %250 = vmatpush1.msra.mxu0 0.0
      %251 = vmatprep.subr.mxu0 0.0
      %252 = vmatpush1.msra.mxu0 0.0
      %253 = vmatprep.subr.mxu0 0.0
      %254 = vmatpush1.msra.mxu0 0.0
      %255 = vmatprep.subr.mxu0 0.0
      %256 = vmatpush1.msra.mxu0 0.0
      %257 = vmatprep.subr.mxu0 0.0
      %258 = vmatpush1.msra.mxu0 0.0
      %259 = vmatprep.subr.mxu0 0.0
      %260 = vmatpush1.msra.mxu0 0.0
      %261 = vmatprep.subr.mxu0 0.0
      %262 = vmatpush1.msra.mxu0 0.0
      %263 = vmatprep.subr.mxu0 0.0
      %264 = vmatpush1.msra.mxu0 0.0
      %265 = vmatprep.subr.mxu0 0.0
      %266 = vmatpush1.msra.mxu0 0.0
      %267 = vmatprep.subr.mxu0 0.0
      %268 = vmatpush1.msra.mxu0 0.0
      %269 = vmatprep.subr.mxu0 0.0
      %270 = vmatpush1.msra.mxu0 0.0
      %271 = vmatprep.subr.mxu0 0.0
      %272 = vmatpush1.msra.mxu0 0.0
      %273 = vmatprep.subr.mxu0 0.0
      %274 = vmatpush1.msra.mxu0 0.0
      %275 = vmatprep.subr.mxu0 0.0
      %276 = vmatpush1.msra.mxu0 0.0
      %277 = vmatprep.subr.mxu0 0.0
      %278 = vmatpush1.msra.mxu0 0.0
      %279 = vmatprep.subr.mxu0 0.0
      %280 = vmatpush1.msra.mxu0 0.0
      %281 = vmatprep.subr.mxu0 0.0
      %282 = vmatpush1.msra.mxu0 0.0
      %283 = vmatprep.subr.mxu0 0.0
      %284 = vmatpush1.msra.mxu0 0.0
      %285 = vmatprep.subr.mxu0 0.0
      %286 = vmatpush1.msra.mxu0 0.0
      %287 = vmatprep.subr.mxu0 0.0
      %288 = vmatpush1.msra.mxu0 0.0
      %289 = vmatprep.subr.mxu0 0.0
      %290 = vmatpush1.msra.mxu0 0.0
      %291 = vmatprep.subr.mxu0 0.0
      %292 = vmatpush1.msra.mxu0 0.0
      %293 = vmatprep.mubr.f32.mxu0 0.0
      %294 = vmatmul.mubr.f32.gmra.mrb[0].mxu0 %v222
      %v295 = vpop.f32.mrb[0].mxu0
      %v296 = vadd.f32 %v216, %v295
      %v297 = vpop.f32.mrb[0].mxu0
      %v298 = vadd.f32 %v216, %v297
      %299 = vdwg.mxu0
      %v300 = vmax.f32 %v296, 0.0
      %v301 = vmax.f32 %v298, 0.0
      %302 = vst [vmem:[%s208] sm:$0xff] %v300
      %303 = vst [vmem:[%s208 + $0x8] sm:$0xff] %v301
      %s304 = smul.u32 2, %s19
      %p305 = scmp.lt.s32.totalorder %s18, 1
      %s306 = scalar_select %p305, %s18, 1
      %p307 = scmp.lt.s32.totalorder %s304, 1
      %s308 = scalar_select %p307, %s304, 1
      %s309 = smul.addr %s306, 2
      %s310 = sadd.s32 %s308, %s309
      %s311 = smul.addr %s310, 8
      %s312 = scalar_lea.vmem %s3, %s311
      // Predicated region
      $region33: #{band_expansion.3} parent=31 // pred_check
        %p313 = pneg %p116
      $region34: #{band_expansion.3} parent=31 // pred_check_branch
        %315 = sbr.rel (%p313) target = $region36
      $region35: #{band_expansion.3} parent=31 // pred_region
        %s316 = smul.u32 2, %s19
      $region36: #{band_expansion.3} parent=31 // pred_fallthru
        _
    $region32: #{band_expansion.3} parent=5 // pred_fallthru
      _
    %p317 = scmp.le.s32.totalorder 2, %s9
    // Predicated region
    $region37: #{band_expansion.3} parent=5 // pred_check
      %p318 = pneg %p317
    $region38: #{band_expansion.3} parent=5 // pred_check_branch
      %320 = sbr.rel (%p318) target = $region40
    $region39: #{band_expansion.3} parent=5 // pred_region
      %s321 = ssub.s32 %s9, 2
      // Predicated region
      $region41: #{band_expansion.3} parent=39 // pred_check
        %p322 = pneg %p122
      $region42: #{band_expansion.3} parent=39 // pred_check_branch
        %324 = sbr.rel (%p322) target = $region44
      $region43: #{band_expansion.3} parent=39 // pred_region
        %s325 = smul.u32 2, %s21
        %p326 = scmp.lt.s32.totalorder %s20, 1
        %s327 = scalar_select %p326, %s20, 1
        %p328 = scmp.lt.s32.totalorder %s325, 1
        %s329 = scalar_select %p328, %s325, 1
        %s330 = smul.addr %s327, 2
        %s331 = sadd.s32 %s329, %s330
        %s332 = smul.addr %s331, 8
        %s333 = scalar_lea.vmem %s3, %s332
      $region44: #{band_expansion.3} parent=39 // pred_fallthru
        _
    $region40: #{band_expansion.3} parent=5 // pred_fallthru
      _
  $region6: #{band_expansion.3} parent=0 // loop_footer
    %s13 = sadd.s32 1, %s9
  $region7: #{band_expansion.3} parent=0 // loop_footer_branch
    %8 = sbr.rel target = $region3
  $region8: #{band_expansion.3} parent=0 // loop_exit
    _

</llo_original>
